<compile_context>
chip_gen: v7x
topology: tpu7x:2x2x1
jax: 0.10.0
libtpu: 0.0.40
codegen_flags: <defaults>
</compile_context>

<pallas_src>
import jax
import jax.numpy as jnp
from jax.experimental import pallas as pl
from jax.experimental.pallas import tpu as pltpu


def _double_linear_relu6_kernel(w_ref, b_ref, xT_ref, o_ref):
    # w_ref: SMEM (2, 2)   b_ref: SMEM (2,)
    # xT_ref: VMEM (1, 2, TS)  -- S on the lane dim (dense)
    # o_ref : VMEM (1, 2, TS)  -- already-permuted (B, D_out, S) layout
    w00 = w_ref[0, 0]
    w01 = w_ref[0, 1]
    w10 = w_ref[1, 0]
    w11 = w_ref[1, 1]
    b0 = b_ref[0]
    b1 = b_ref[1]

    x = xT_ref[...].astype(jnp.float32)      # (1, 2, TS)
    x0 = x[:, 0, :]                          # (1, TS) -- sublane select, cheap
    x1 = x[:, 1, :]                          # (1, TS)

    # First linear (x @ W.T + b) followed by ReLU6, as VPU FMA chains.
    h0 = jnp.clip(x0 * w00 + x1 * w01 + b0, 0.0, 6.0)
    h1 = jnp.clip(x0 * w10 + x1 * w11 + b1, 0.0, 6.0)

    # Second linear (same weights / bias, as in the PyTorch module) + ReLU6.
    v0 = jnp.clip(h0 * w00 + h1 * w01 + b0, 0.0, 6.0)
    v1 = jnp.clip(h0 * w10 + h1 * w11 + b1, 0.0, 6.0)

    # Two lane-dense row stores into the (B, D_out, S) output tile.
    o_ref[:, 0, :] = v0.astype(o_ref.dtype)
    o_ref[:, 1, :] = v1.astype(o_ref.dtype)


def model_forward(x, weight, bias):
    """x: (B, S, 2); weight: (2, 2); bias: (2,).  Returns (B, 2, S)."""
    B, S, D_in = x.shape
    D_out = weight.shape[0]
    assert D_in == 2 and D_out == 2, "kernel specialized for nn.Linear(2, 2)"

    # Lane-dense presentation: S becomes the last (lane) dimension.
    xT = jnp.swapaxes(x, 1, 2)                           # (B, 2, S)

    # Sequence tile: a multiple of 128 lanes when possible (dense vld/vst,
    # pipelined DMA, masked edge block for the remainder); otherwise the full
    # (small) extent.
    if S < 128:
        tile_s = S
    else:
        tile_s = min(1024, (S // 128) * 128)
    grid = (B, pl.cdiv(S, tile_s))

    return pl.pallas_call(
        _double_linear_relu6_kernel,
        out_shape=jax.ShapeDtypeStruct((B, D_out, S), x.dtype),
        grid=grid,
        in_specs=[
            pl.BlockSpec((2, 2), lambda b, s: (0, 0),
                         memory_space=pltpu.MemorySpace.SMEM),      # weight
            pl.BlockSpec((2,), lambda b, s: (0,),
                         memory_space=pltpu.MemorySpace.SMEM),      # bias
            pl.BlockSpec((1, 2, tile_s), lambda b, s: (b, 0, s)),   # xT
        ],
        out_specs=pl.BlockSpec((1, 2, tile_s), lambda b, s: (b, 0, s)),
        compiler_params=pltpu.CompilerParams(
            dimension_semantics=("parallel", "parallel")),
    )(weight, bias, xT)


def model_reference(x, weight, bias):
    """Pure-JAX reference for correctness check (PyTorch module semantics)."""
    h = jnp.clip(jnp.einsum('bsd,ed->bse', x, weight) + bias, 0.0, 6.0)
    v = jnp.clip(jnp.einsum('bsd,ed->bse', h, weight) + bias, 0.0, 6.0)
    return jnp.transpose(v, (0, 2, 1))


if __name__ == "__main__":
    key = jax.random.PRNGKey(0)
    kx, kw, kb, kx2 = jax.random.split(key, 4)

    D = 2
    bound = 1.0 / (D ** 0.5)
    weight = jax.random.uniform(kw, (D, D), jnp.float32, -bound, bound)
    bias = jax.random.uniform(kb, (D,), jnp.float32, -bound, bound)

    # Small shape consistent with the module (batch=2, seq=8, features=2).
    B, S = 2, 8
    x = jax.random.normal(kx, (B, S, D), dtype=jnp.float32)
    y = jax.block_until_ready(model_forward(x, weight, bias))
    assert y.shape == (B, D, S)
    assert jnp.allclose(y, model_reference(x, weight, bias), atol=1e-5, rtol=1e-5)

    # Exercise the gridded path with a masked edge tile (S not a multiple of 128).
    B2, S2 = 1, 200
    x2 = jax.random.normal(kx2, (B2, S2, D), dtype=jnp.float32)
    y2 = jax.block_until_ready(model_forward(x2, weight, bias))
    assert y2.shape == (B2, D, S2)
    assert jnp.allclose(y2, model_reference(x2, weight, bias), atol=1e-5, rtol=1e-5)

    print("KERNEL_OK")
</pallas_src>

<mosaic_0001>
module attributes {stable_mosaic.version = 11 : i64} {
  func.func @_double_linear_relu6_kernel(%arg0: i32, %arg1: i32, %arg2: memref<2x2xf32, #tpu.memory_space<smem>>, %arg3: memref<2xf32, #tpu.memory_space<smem>>, %arg4: memref<1x2x8xf32, #tpu.memory_space<vmem>>, %arg5: memref<1x2x8xf32, #tpu.memory_space<vmem>>) attributes {dimension_semantics = [#tpu.dimension_semantics<parallel>, #tpu.dimension_semantics<parallel>], iteration_bounds = array<i64: 2, 1>, scalar_prefetch = 0 : i64, scratch_operands = 0 : i64, tpu.core_type = #tpu.core_type<tc>, window_params = [{transform_indices = @transform_0, window_bounds = array<i64: 2, 2>}, {transform_indices = @transform_1, window_bounds = array<i64: 2>}, {transform_indices = @transform_2, window_bounds = array<i64: 1, 2, 8>}, {transform_indices = @transform_3, window_bounds = array<i64: 1, 2, 8>}]} {
    %c0 = arith.constant 0 : index
    %c0_0 = arith.constant 0 : index
    %0 = memref.load %arg2[%c0, %c0_0] : memref<2x2xf32, #tpu.memory_space<smem>>
    %c0_1 = arith.constant 0 : index
    %c1 = arith.constant 1 : index
    %1 = memref.load %arg2[%c0_1, %c1] : memref<2x2xf32, #tpu.memory_space<smem>>
    %c1_2 = arith.constant 1 : index
    %c0_3 = arith.constant 0 : index
    %2 = memref.load %arg2[%c1_2, %c0_3] : memref<2x2xf32, #tpu.memory_space<smem>>
    %c1_4 = arith.constant 1 : index
    %c1_5 = arith.constant 1 : index
    %3 = memref.load %arg2[%c1_4, %c1_5] : memref<2x2xf32, #tpu.memory_space<smem>>
    %c0_6 = arith.constant 0 : index
    %4 = memref.load %arg3[%c0_6] : memref<2xf32, #tpu.memory_space<smem>>
    %c1_7 = arith.constant 1 : index
    %5 = memref.load %arg3[%c1_7] : memref<2xf32, #tpu.memory_space<smem>>
    %c0_8 = arith.constant 0 : index
    %c0_9 = arith.constant 0 : index
    %c0_10 = arith.constant 0 : index
    %6 = vector.load %arg4[%c0_8, %c0_9, %c0_10] : memref<1x2x8xf32, #tpu.memory_space<vmem>>, vector<1x2x8xf32>
    %7 = vector.extract_strided_slice %6 {offsets = [0, 0, 0], sizes = [1, 1, 8], strides = [1, 1, 1]} : vector<1x2x8xf32> to vector<1x1x8xf32>
    %8 = vector.shape_cast %7 : vector<1x1x8xf32> to vector<1x8xf32>
    %9 = vector.extract_strided_slice %6 {offsets = [0, 1, 0], sizes = [1, 1, 8], strides = [1, 1, 1]} : vector<1x2x8xf32> to vector<1x1x8xf32>
    %10 = vector.shape_cast %9 : vector<1x1x8xf32> to vector<1x8xf32>
    %11 = vector.broadcast %0 : f32 to vector<1x8xf32>
    %12 = arith.mulf %8, %11 : vector<1x8xf32>
    %13 = vector.broadcast %1 : f32 to vector<1x8xf32>
    %14 = arith.mulf %10, %13 : vector<1x8xf32>
    %15 = arith.addf %12, %14 : vector<1x8xf32>
    %16 = vector.broadcast %4 : f32 to vector<1x8xf32>
    %17 = arith.addf %15, %16 : vector<1x8xf32>
    %cst = arith.constant 0.000000e+00 : f32
    %cst_11 = arith.constant 6.000000e+00 : f32
    %18 = vector.broadcast %cst : f32 to vector<1x8xf32>
    %19 = arith.maximumf %18, %17 : vector<1x8xf32>
    %20 = vector.broadcast %cst_11 : f32 to vector<1x8xf32>
    %21 = arith.minimumf %20, %19 : vector<1x8xf32>
    %22 = vector.broadcast %2 : f32 to vector<1x8xf32>
    %23 = arith.mulf %8, %22 : vector<1x8xf32>
    %24 = vector.broadcast %3 : f32 to vector<1x8xf32>
    %25 = arith.mulf %10, %24 : vector<1x8xf32>
    %26 = arith.addf %23, %25 : vector<1x8xf32>
    %27 = vector.broadcast %5 : f32 to vector<1x8xf32>
    %28 = arith.addf %26, %27 : vector<1x8xf32>
    %cst_12 = arith.constant 0.000000e+00 : f32
    %cst_13 = arith.constant 6.000000e+00 : f32
    %29 = vector.broadcast %cst_12 : f32 to vector<1x8xf32>
    %30 = arith.maximumf %29, %28 : vector<1x8xf32>
    %31 = vector.broadcast %cst_13 : f32 to vector<1x8xf32>
    %32 = arith.minimumf %31, %30 : vector<1x8xf32>
    %33 = vector.broadcast %0 : f32 to vector<1x8xf32>
    %34 = arith.mulf %21, %33 : vector<1x8xf32>
    %35 = vector.broadcast %1 : f32 to vector<1x8xf32>
    %36 = arith.mulf %32, %35 : vector<1x8xf32>
    %37 = arith.addf %34, %36 : vector<1x8xf32>
    %38 = vector.broadcast %4 : f32 to vector<1x8xf32>
    %39 = arith.addf %37, %38 : vector<1x8xf32>
    %cst_14 = arith.constant 0.000000e+00 : f32
    %cst_15 = arith.constant 6.000000e+00 : f32
    %40 = vector.broadcast %cst_14 : f32 to vector<1x8xf32>
    %41 = arith.maximumf %40, %39 : vector<1x8xf32>
    %42 = vector.broadcast %cst_15 : f32 to vector<1x8xf32>
    %43 = arith.minimumf %42, %41 : vector<1x8xf32>
    %44 = vector.broadcast %2 : f32 to vector<1x8xf32>
    %45 = arith.mulf %21, %44 : vector<1x8xf32>
    %46 = vector.broadcast %3 : f32 to vector<1x8xf32>
    %47 = arith.mulf %32, %46 : vector<1x8xf32>
    %48 = arith.addf %45, %47 : vector<1x8xf32>
    %49 = vector.broadcast %5 : f32 to vector<1x8xf32>
    %50 = arith.addf %48, %49 : vector<1x8xf32>
    %cst_16 = arith.constant 0.000000e+00 : f32
    %cst_17 = arith.constant 6.000000e+00 : f32
    %51 = vector.broadcast %cst_16 : f32 to vector<1x8xf32>
    %52 = arith.maximumf %51, %50 : vector<1x8xf32>
    %53 = vector.broadcast %cst_17 : f32 to vector<1x8xf32>
    %54 = arith.minimumf %53, %52 : vector<1x8xf32>
    %c0_18 = arith.constant 0 : index
    %c0_19 = arith.constant 0 : index
    %c0_20 = arith.constant 0 : index
    %55 = vector.load %arg5[%c0_18, %c0_19, %c0_20] : memref<1x2x8xf32, #tpu.memory_space<vmem>>, vector<1x1x8xf32>
    %56 = vector.shape_cast %55 : vector<1x1x8xf32> to vector<1x8xf32>
    %57 = vector.shape_cast %43 : vector<1x8xf32> to vector<1x1x8xf32>
    tpu.vector_store %arg5[%c0_18, %c0_19, %c0_20], %57 {strides = array<i32>} : memref<1x2x8xf32, #tpu.memory_space<vmem>>, vector<1x1x8xf32>,
    %c0_21 = arith.constant 0 : index
    %c1_22 = arith.constant 1 : index
    %c0_23 = arith.constant 0 : index
    %58 = vector.load %arg5[%c0_21, %c1_22, %c0_23] : memref<1x2x8xf32, #tpu.memory_space<vmem>>, vector<1x1x8xf32>
    %59 = vector.shape_cast %58 : vector<1x1x8xf32> to vector<1x8xf32>
    %60 = vector.shape_cast %54 : vector<1x8xf32> to vector<1x1x8xf32>
    tpu.vector_store %arg5[%c0_21, %c1_22, %c0_23], %60 {strides = array<i32>} : memref<1x2x8xf32, #tpu.memory_space<vmem>>, vector<1x1x8xf32>,
    return
  }
  func.func @transform_0(%arg0: i32, %arg1: i32) -> (i32, i32) {
    %c0_i32 = arith.constant 0 : i32
    %c0_i32_0 = arith.constant 0 : i32
    %c0_i32_1 = arith.constant 0 : i32
    return %c0_i32, %c0_i32_0 : i32, i32
  }
  func.func @transform_1(%arg0: i32, %arg1: i32) -> i32 {
    %c0_i32 = arith.constant 0 : i32
    %c0_i32_0 = arith.constant 0 : i32
    return %c0_i32 : i32
  }
  func.func @transform_2(%arg0: i32, %arg1: i32) -> (i32, i32, i32) {
    %c0_i32 = arith.constant 0 : i32
    %c0_i32_0 = arith.constant 0 : i32
    return %arg0, %c0_i32, %arg1 : i32, i32, i32
  }
  func.func @transform_3(%arg0: i32, %arg1: i32) -> (i32, i32, i32) {
    %c0_i32 = arith.constant 0 : i32
    %c0_i32_0 = arith.constant 0 : i32
    return %arg0, %c0_i32, %arg1 : i32, i32, i32
  }
}

</mosaic_0001>

<llo_original>
// kernel: tpu_custom_call.1
$region0: #{tpu_custom_call.1}
  #allocation0 [shape = 'u32[]', space=smem, size = 0x4, offset = 0x4, fixed_abs, tag = 'smem constant byte address 0x4 - core index']
  #allocation1 [shape = 'u32[144,128]{1,0:T(1,128)}', space=vmem, size = 0x12000, scoped, tag = 'internal scratch']
  %s0 = inlined_call_operand.hbm [shape: f32[2,2], index: 0, kind: input, shape index: {}]
  %s1 = inlined_call_operand.vmem [shape: f32[2], index: 1, kind: input, shape index: {}]
  %s2 = inlined_call_operand.vmem [shape: f32[2,2,8], index: 2, kind: input, shape index: {}]
  %s3 = inlined_call_operand.hbm [shape: f32[2,2,8], index: 3, kind: output, shape index: {}]
  %s4 = sld [smem:[#allocation0]]
  $region53: #{tpu_custom_call.1} parent=0
    _
  %s6 = ssub.s32 1, %s4
  %s7 = scalar_select 0, %s6, %s4
  $region1: #{tpu_custom_call.1} parent=0
    #allocation2 [shape = 'u8[1024]{0}', space=smem, size = 0x400, scoped, tag = 'input window, operand 0, single buffered']
    #allocation3 [shape = 's32[2]{0}', space=sflag, size = 0x8, scoped, tag = 'scoped memory for tpu_custom_call.1']
    #allocation4 [shape = 's32[2]{0}', space=sflag, size = 0x8, scoped, tag = 'scoped memory for tpu_custom_call.1']
    #allocation5 [shape = 's32[2]{0}', space=sflag, size = 0x8, scoped, tag = 'scoped memory for tpu_custom_call.1']
    #allocation6 [shape = 'u8[512]{0}', space=smem, size = 0x200, scoped, tag = 'input window, operand 1, single buffered']
    #allocation7 [shape = 'u8[2048]{0}', space=vmem, size = 0x800, scoped, tag = 'output window, operand 0']
    %8 = vsyncpa [#allocation4], 0
    %9 = vsyncpa [#allocation5], 0
    %10 = vsyncpa [#allocation3], 0
    %s11 = scalar_lea.sflag [#allocation3], 1
    %12 = vsyncpa %s11, 0
    loop: start=0, step=1, limit=4
    $region2: #{tpu_custom_call.1} parent=1 // loop_pre_header
      _
    $region3: #{tpu_custom_call.1} parent=1 // loop_header
      %s14 = sphi 0, %s18
      %p15 = scmp.ge.s32.totalorder %s14, 4
      %s21 = sphi 0, %s33
      %s22 = sphi 0, %s29
      %s23 = sphi 0, %s21
      %s24 = sphi 0, %s22
      %s25 = sphi 0, %s23
      %s26 = sphi 0, %s24
      %s34 = sphi 0, %s34
      %s36 = sphi 0, %s34
      %s37 = sphi 0, %s36
      %s51 = sphi 0, %s37
      %s55 = sphi 0, %s55
      %s57 = sphi 0, %s55
      %s58 = sphi 0, %s57
      %s72 = sphi 0, %s58
      %s80 = sphi 0, %s82
      %s83 = sphi 0, %s80
      %s84 = sphi 0, %s83
      %s100 = sphi 0, %s84
      %s108 = sphi 0, %s110
      %s111 = sphi 0, %s108
      %s112 = sphi 0, %s111
      %s128 = sphi 0, %s112
    $region4: #{tpu_custom_call.1} parent=1 // loop_header_branch
      %17 = sbr.rel (%p15) target = $region8
    $region5: #{tpu_custom_call.1} parent=1 // loop_body
      %s19 = ssub.s32 %s14, 1
      %s20 = ssub.s32 %s14, 2
      %s27 = sadd.s32 1, %s22
      %p28 = scmp.ge.s32.totalorder %s27, 1
      %s29 = scalar_select %p28, 0, %s27
      %s30 = sadd.s32 1, %s21
      %s31 = scalar_select %p28, %s30, %s21
      %p32 = scmp.ge.s32.totalorder %s31, 2
      %s33 = scalar_select %p32, 0, %s31
      %s35 = sadd.s32 %s34, 1
      %p38 = scmp.eq.s32.totalorder %s14, 1
      %p39 = scmp.ne.s32.totalorder %s34, %s36
      %p40 = scmp.eq.s32.totalorder %s14, 0
      %p41 = por %p39, %p40
      %p42 = scmp.ne.s32.totalorder %s34, %s36
      %p43 = scmp.eq.s32.totalorder %s19, 1
      %p44 = por %p42, %p43
      %p45 = scmp.ne.s32.totalorder %s36, %s37
      %p46 = scmp.eq.s32.totalorder %s19, 0
      %p47 = por %p45, %p46
      %p48 = scmp.ne.s32.totalorder %s36, %s37
      %p49 = scmp.eq.s32.totalorder %s20, 1
      %p50 = por %p48, %p49
      %p52 = scmp.ne.s32.totalorder %s37, %s51
      %p53 = scmp.eq.s32.totalorder %s20, 0
      %p54 = por %p52, %p53
      %s56 = sadd.s32 %s55, 1
      %p59 = scmp.eq.s32.totalorder %s14, 1
      %p60 = scmp.ne.s32.totalorder %s55, %s57
      %p61 = scmp.eq.s32.totalorder %s14, 0
      %p62 = por %p60, %p61
      %p63 = scmp.ne.s32.totalorder %s55, %s57
      %p64 = scmp.eq.s32.totalorder %s19, 1
      %p65 = por %p63, %p64
      %p66 = scmp.ne.s32.totalorder %s57, %s58
      %p67 = scmp.eq.s32.totalorder %s19, 0
      %p68 = por %p66, %p67
      %p69 = scmp.ne.s32.totalorder %s57, %s58
      %p70 = scmp.eq.s32.totalorder %s20, 1
      %p71 = por %p69, %p70
      %p73 = scmp.ne.s32.totalorder %s58, %s72
      %p74 = scmp.eq.s32.totalorder %s20, 0
      %p75 = por %p73, %p74
      %s76 = ssub.s32 %s21, %s33
      %s77 = ssub.s32 %s22, %s29
      %s78 = sor.u32 %s76, %s77
      %p79 = scmp.eq.s32.totalorder %s78, 0
      %s81 = sadd.s32 %s80, 1
      %s82 = scalar_select %p79, %s80, %s81
      %p85 = pneg %p79
      %p86 = scmp.eq.s32.totalorder %s14, 1
      %p87 = por %p85, %p86
      %p88 = scmp.ne.s32.totalorder %s80, %s83
      %p89 = scmp.eq.s32.totalorder %s14, 0
      %p90 = por %p88, %p89
      %p91 = scmp.ne.s32.totalorder %s80, %s83
      %p92 = scmp.eq.s32.totalorder %s19, 1
      %p93 = por %p91, %p92
      %p94 = scmp.ne.s32.totalorder %s83, %s84
      %p95 = scmp.eq.s32.totalorder %s19, 0
      %p96 = por %p94, %p95
      %p97 = scmp.ne.s32.totalorder %s83, %s84
      %p98 = scmp.eq.s32.totalorder %s20, 1
      %p99 = por %p97, %p98
      %p101 = scmp.ne.s32.totalorder %s84, %s100
      %p102 = scmp.eq.s32.totalorder %s20, 0
      %p103 = por %p101, %p102
      %s104 = ssub.s32 %s21, %s33
      %s105 = ssub.s32 %s22, %s29
      %s106 = sor.u32 %s104, %s105
      %p107 = scmp.eq.s32.totalorder %s106, 0
      %s109 = sadd.s32 %s108, 1
      %s110 = scalar_select %p107, %s108, %s109
      %p113 = pneg %p107
      %p114 = scmp.eq.s32.totalorder %s14, 1
      %p115 = por %p113, %p114
      %p116 = scmp.ne.s32.totalorder %s108, %s111
      %p117 = scmp.eq.s32.totalorder %s14, 0
      %p118 = por %p116, %p117
      %p119 = scmp.ne.s32.totalorder %s108, %s111
      %p120 = scmp.eq.s32.totalorder %s19, 1
      %p121 = por %p119, %p120
      %p122 = scmp.ne.s32.totalorder %s111, %s112
      %p123 = scmp.eq.s32.totalorder %s19, 0
      %p124 = por %p122, %p123
      %p125 = scmp.ne.s32.totalorder %s111, %s112
      %p126 = scmp.eq.s32.totalorder %s20, 1
      %p127 = por %p125, %p126
      %p129 = scmp.ne.s32.totalorder %s112, %s128
      %p130 = scmp.eq.s32.totalorder %s20, 0
      %p131 = por %p129, %p130
      %p132 = scmp.le.s32.totalorder 1, %s14
      %p133 = scmp.lt.s32.totalorder %s14, 3
      %p134 = pnand %p132, %p133
      %p135 = pneg %p134
      // Predicated region
      $region9: #{tpu_custom_call.1} parent=5 // pred_check
        _
      $region10: #{tpu_custom_call.1} parent=5 // pred_check_branch
        %137 = sbr.rel (%p134) target = $region12
      $region11: #{tpu_custom_call.1} parent=5 // pred_region
        %s138 = ssub.s32 %s14, 1
        // Predicated region
        $region13: #{tpu_custom_call.1} parent=11 // pred_check
          %p139 = pneg %p47
        $region14: #{tpu_custom_call.1} parent=11 // pred_check_branch
          %141 = sbr.rel (%p139) target = $region16
        $region15: #{tpu_custom_call.1} parent=11 // pred_region
          %s143 = ssub.s32 32, 32
          %144 = vsyncadd [#allocation4], %s143
          %147 = dma.hbm_to_smem %s0, 32, [#allocation2], [#allocation4]
        $region16: #{tpu_custom_call.1} parent=11 // pred_fallthru
          _
        // Predicated region
        $region17: #{tpu_custom_call.1} parent=11 // pred_check
          %p148 = pneg %p68
        $region18: #{tpu_custom_call.1} parent=11 // pred_check_branch
          %150 = sbr.rel (%p148) target = $region20
        $region19: #{tpu_custom_call.1} parent=11 // pred_region
          %s152 = ssub.s32 16, 16
          %153 = vsyncadd [#allocation5], %s152
          %s155 = sshll.u32 %s1, 4
          %s156 = int_to_ptr.vmem [resolvable:$true] %s155
          %158 = dma.vmem_to_smem %s156, 16, [#allocation6], [#allocation5]
        $region20: #{tpu_custom_call.1} parent=11 // pred_fallthru
          _
      $region12: #{tpu_custom_call.1} parent=5 // pred_fallthru
        _
      %p159 = scmp.lt.s32.totalorder %s14, 2
      // Predicated region
      $region21: #{tpu_custom_call.1} parent=5 // pred_check
        %p160 = pneg %p159
      $region22: #{tpu_custom_call.1} parent=5 // pred_check_branch
        %162 = sbr.rel (%p160) target = $region24
      $region23: #{tpu_custom_call.1} parent=5 // pred_region
        // Predicated region
        $region25: #{tpu_custom_call.1} parent=23 // pred_check
          %p163 = pneg %p90
        $region26: #{tpu_custom_call.1} parent=23 // pred_check_branch
          %165 = sbr.rel (%p163) target = $region28
        $region27: #{tpu_custom_call.1} parent=23 // pred_region
          %p166 = scmp.lt.s32.totalorder %s21, 1
          %s167 = scalar_select %p166, %s21, 1
          %p168 = scmp.lt.s32.totalorder %s22, 0
          %s169 = scalar_select %p168, %s22, 0
          %s170 = sadd.s32 %s169, %s167
          %s171 = smul.addr %s170, 2
          %s172 = scalar_lea.vmem %s2, %s171
        $region28: #{tpu_custom_call.1} parent=23 // pred_fallthru
          _
      $region24: #{tpu_custom_call.1} parent=5 // pred_fallthru
        _
      %p173 = scmp.le.s32.totalorder 1, %s14
      %p174 = scmp.lt.s32.totalorder %s14, 3
      %p175 = pnand %p173, %p174
      %p176 = pneg %p175
      // Predicated region
      $region29: #{tpu_custom_call.1} parent=5 // pred_check
        _
      $region30: #{tpu_custom_call.1} parent=5 // pred_check_branch
        %178 = sbr.rel (%p175) target = $region32
      $region31: #{tpu_custom_call.1} parent=5 // pred_region
        %s179 = ssub.s32 %s14, 1
        // Predicated region
        $region33: #{tpu_custom_call.1} parent=31 // pred_check
          %p180 = pneg %p47
        $region34: #{tpu_custom_call.1} parent=31 // pred_check_branch
          %182 = sbr.rel (%p180) target = $region36
        $region35: #{tpu_custom_call.1} parent=31 // pred_region
          %183 = dma.done [#allocation4], 32
        $region36: #{tpu_custom_call.1} parent=31 // pred_fallthru
          _
        // Predicated region
        $region37: #{tpu_custom_call.1} parent=31 // pred_check
          %p184 = pneg %p68
        $region38: #{tpu_custom_call.1} parent=31 // pred_check_branch
          %186 = sbr.rel (%p184) target = $region40
        $region39: #{tpu_custom_call.1} parent=31 // pred_region
          %187 = dma.done [#allocation5], 16
        $region40: #{tpu_custom_call.1} parent=31 // pred_fallthru
          _
        %188 = sfence
        %p189 = pneg %p47
        %p190 = pneg %p44
        %p191 = pneg %p68
        %p192 = pneg %p65
        %p193 = scmp.lt.s32.totalorder %s23, 1
        %s194 = scalar_select %p193, %s23, 1
        %p195 = scmp.lt.s32.totalorder %s24, 0
        %s196 = scalar_select %p195, %s24, 0
        %s197 = sadd.s32 %s196, %s194
        %s198 = smul.addr %s197, 2
        %s199 = scalar_lea.vmem %s2, %s198
        %p200 = pneg %p96
        %p201 = pneg %p93
        %p202 = pneg %p124
        %p203 = pneg %p121
        %s204 = sand.u32 %s111, 1
        %s205 = scalar_lea.sflag [#allocation3], %s204
        %s206 = sand.u32 %s111, 1
        %s207 = smul.addr %s206, 2
        %s208 = scalar_lea.vmem [#allocation7], %s207
        %p209 = scmp.lt.s32.totalorder %s23, 1
        %s210 = scalar_select %p209, %s23, 1
        %p211 = scmp.lt.s32.totalorder %s24, 0
        %s212 = scalar_select %p211, %s24, 0
        %s213 = sadd.s32 %s212, %s210
        %s214 = smul.addr %s213, 2
        %s215 = scalar_lea.vmem %s2, %s214
        %s216 = sld [smem:[#allocation2]]
        %s217 = sld [smem:[#allocation2 + $0x1]]
        %s218 = sld [smem:[#allocation2 + $0x80]]
        %s219 = sld [smem:[#allocation2 + $0x81]]
        %s220 = sld [smem:[#allocation6]]
        %s221 = sld [smem:[#allocation6 + $0x1]]
        %v222 = vld [vmem:[%s215] sm:$0x3]
        %v223 = vstv %s216
        %v224 = vmul.f32 %v222, %v223
        %v225 = vstv %s217
        %v226 = vmul.f32 %v222, %v225
        %v228 = vrot.slane %v226, 1
        %v230 = vadd.f32 %v224, %v228
        %v231 = vstv %s220
        %v232 = vadd.f32 %v230, %v231
        %v233 = vmax.f32 %v232, 0.0
        %v234 = vmin.f32 %v233, 6.0
        %v235 = vstv %s218
        %v236 = vmul.f32 %v222, %v235
        %v237 = vstv %s219
        %v238 = vmul.f32 %v222, %v237
        %v240 = vrot.slane %v238, 1
        %v242 = vadd.f32 %v236, %v240
        %v243 = vstv %s221
        %v244 = vadd.f32 %v242, %v243
        %v245 = vmax.f32 %v244, 0.0
        %v246 = vmin.f32 %v245, 6.0
        %v247 = vmul.f32 %v234, %v223
        %v248 = vmul.f32 %v246, %v225
        %v249 = vadd.f32 %v247, %v248
        %v250 = vadd.f32 %v249, %v231
        %v251 = vmax.f32 %v250, 0.0
        %v252 = vmin.f32 %v251, 6.0
        %v253 = vmul.f32 %v234, %v235
        %v254 = vmul.f32 %v246, %v237
        %v255 = vadd.f32 %v253, %v254
        %v256 = vadd.f32 %v255, %v243
        %v257 = vmax.f32 %v256, 0.0
        %v258 = vmin.f32 %v257, 6.0
        %vm259 = vcmask 57344
        %260 = vst.msk [vmem:[%s208] sm:$0x1] %vm259, %v252
        %261 = vst.msk [vmem:[%s208 + $0x1] sm:$0x1] %vm259, %v258
        %s262 = sand.u32 %s111, 1
        %s263 = scalar_lea.sflag [#allocation3], %s262
        %s264 = sand.u32 %s111, 1
        %s265 = smul.addr %s264, 2
        %s266 = scalar_lea.vmem [#allocation7], %s265
        // Predicated region
        $region41: #{tpu_custom_call.1} parent=31 // pred_check
          %p267 = pneg %p121
        $region42: #{tpu_custom_call.1} parent=31 // pred_check_branch
          %269 = sbr.rel (%p267) target = $region44
        $region43: #{tpu_custom_call.1} parent=31 // pred_region
          %s271 = ssub.s32 32, 32
          %272 = vsyncadd %s263, %s271
          %s273 = sadd.s32 %s24, %s23
          %s274 = smul.addr %s273, 32
          %s275 = scalar_lea.hbm %s3, %s274
          %s277 = sshll.u32 %s266, 4
          %s278 = int_to_ptr.vmem [resolvable:$true] %s277
          %280 = dma.vmem_to_hbm [thread:$0]  %s278, 32, %s275, %s263
        $region44: #{tpu_custom_call.1} parent=31 // pred_fallthru
          _
      $region32: #{tpu_custom_call.1} parent=5 // pred_fallthru
        _
      %p281 = scmp.le.s32.totalorder 2, %s14
      // Predicated region
      $region45: #{tpu_custom_call.1} parent=5 // pred_check
        %p282 = pneg %p281
      $region46: #{tpu_custom_call.1} parent=5 // pred_check_branch
        %284 = sbr.rel (%p282) target = $region48
      $region47: #{tpu_custom_call.1} parent=5 // pred_region
        %s285 = ssub.s32 %s14, 2
        // Predicated region
        $region49: #{tpu_custom_call.1} parent=47 // pred_check
          %p286 = pneg %p127
        $region50: #{tpu_custom_call.1} parent=47 // pred_check_branch
          %288 = sbr.rel (%p286) target = $region52
        $region51: #{tpu_custom_call.1} parent=47 // pred_region
          %s289 = sand.u32 %s112, 1
          %s290 = scalar_lea.sflag [#allocation3], %s289
          %s291 = sand.u32 %s112, 1
          %s292 = smul.addr %s291, 2
          %s293 = scalar_lea.vmem [#allocation7], %s292
          %294 = dma.done %s290, 32
        $region52: #{tpu_custom_call.1} parent=47 // pred_fallthru
          _
      $region48: #{tpu_custom_call.1} parent=5 // pred_fallthru
        _
    $region6: #{tpu_custom_call.1} parent=1 // loop_footer
      %s18 = sadd.s32 1, %s14
    $region7: #{tpu_custom_call.1} parent=1 // loop_footer_branch
      %13 = sbr.rel target = $region3
    $region8: #{tpu_custom_call.1} parent=1 // loop_exit
      _
    %295 = vsyncpa [#allocation3], 1
    %s296 = scalar_lea.sflag [#allocation3], 1
    %297 = vsyncpa %s296, 1
    %298 = vsyncpa [#allocation4], 1
    %s299 = scalar_lea.sflag [#allocation4], 1
    %300 = vsyncpa %s299, 1
    %301 = vsyncpa [#allocation5], 1
    %s302 = scalar_lea.sflag [#allocation5], 1
    %303 = vsyncpa %s302, 1

</llo_original>
